<compile_context>
chip_gen: v7x
topology: tpu7x:2x2x1
jax: 0.10.0
libtpu: 0.0.40
codegen_flags: <defaults>
</compile_context>

<pallas_src>
import functools

import jax
import jax.numpy as jnp
from jax.experimental import pallas as pl
from jax.experimental.pallas import tpu as pltpu

_LANES = 128


def _weighted_focal_kernel(n_ref, x_ref, t_ref, out_ref,
                           acc_all, acc_pos, acc_npos, acc_nzero, acc_nvalid,
                           *, alpha, gamma, gamma_int, tile_rows):
    step = pl.program_id(0)

    @pl.when(step == 0)
    def _init():
        acc_all[...] = jnp.zeros_like(acc_all)
        acc_pos[...] = jnp.zeros_like(acc_pos)
        acc_npos[...] = jnp.zeros_like(acc_npos)
        acc_nzero[...] = jnp.zeros_like(acc_nzero)
        acc_nvalid[...] = jnp.zeros_like(acc_nvalid)

    x = x_ref[...].astype(jnp.float32)          # (tile_rows, 128) logits
    t = t_ref[...].astype(jnp.float32)          # (tile_rows, 128) targets

    # Valid mask from the flat element index vs N (no sentinel padding).
    row = jax.lax.broadcasted_iota(jnp.int32, (tile_rows, _LANES), 0)
    lane = jax.lax.broadcasted_iota(jnp.int32, (tile_rows, _LANES), 1)
    flat = (step * tile_rows + row) * _LANES + lane
    valid = flat < n_ref[0]

    is_pos = jnp.logical_and(valid, t == 1.0)
    is_zero = jnp.logical_and(valid, t == 0.0)

    # Stable BCE with logits, reduction='none'  (matches PyTorch StableBCELoss;
    # log1p(exp(-|x|)) would be marginally more accurate).
    neg_abs = -jnp.abs(x)
    bce = jnp.maximum(x, 0.0) - x * t + jnp.log(1.0 + jnp.exp(neg_abs))

    # Focal modulation; explicit multiplies for integer gamma (no pow).
    pt = jnp.exp(-bce)
    omp = 1.0 - pt
    if gamma_int is not None:
        if gamma_int == 0:
            mod = jnp.ones_like(omp)
        else:
            mod = omp
            for _ in range(gamma_int - 1):
                mod = mod * omp
    else:
        mod = omp ** gamma
    f = alpha * mod * bce

    f = jnp.where(valid, f, 0.0)
    f_pos = jnp.where(is_pos, f, 0.0)

    # Tile-shaped accumulators: VPU adds only in the steady state.
    acc_all[...] += f
    acc_pos[...] += f_pos
    acc_npos[...] += is_pos.astype(jnp.float32)
    acc_nzero[...] += is_zero.astype(jnp.float32)
    acc_nvalid[...] += valid.astype(jnp.float32)

    @pl.when(step == pl.num_programs(0) - 1)
    def _finalize():
        s_all = jnp.sum(acc_all[...])
        s_pos = jnp.sum(acc_pos[...])
        n_pos = jnp.sum(acc_npos[...])
        n_zero = jnp.sum(acc_nzero[...])
        n_valid = jnp.sum(acc_nvalid[...])
        pos_weight = n_zero / (1.0 + n_pos)
        # sum(F * w) = sum(F) + (pos_weight - 1) * sum(F on t==1)
        # Precondition: N > 0 (mean over an empty tensor is NaN, as in torch).
        out_ref[0] = (s_all + (pos_weight - 1.0) * s_pos) / n_valid


def weighted_focal_loss(inputs, targets, alpha=1.0, gamma=2.0, tile_rows=512):
    """inputs, targets: 1-D arrays of identical length N (N > 0). Returns f32 scalar."""
    assert inputs.ndim == 1 and inputs.shape == targets.shape
    n = inputs.shape[0]

    # Lane-dense 2-D layout, padded to whole (tile_rows, 128) tiles.
    rows = max(-(-n // _LANES), 1)
    rows = -(-rows // 8) * 8
    if rows <= tile_rows:
        tile_rows = rows
        grid_rows = 1
    else:
        grid_rows = -(-rows // tile_rows)
        rows = grid_rows * tile_rows
    total = rows * _LANES

    x = jnp.pad(inputs, (0, total - n)).reshape(rows, _LANES)
    t = jnp.pad(targets, (0, total - n)).reshape(rows, _LANES)
    n_arr = jnp.array([n], jnp.int32)

    gamma_f = float(gamma)
    gamma_int = int(gamma_f) if (gamma_f.is_integer() and 0.0 <= gamma_f <= 8.0) else None

    kernel = functools.partial(
        _weighted_focal_kernel,
        alpha=float(alpha), gamma=gamma_f, gamma_int=gamma_int,
        tile_rows=tile_rows)

    out = pl.pallas_call(
        kernel,
        out_shape=jax.ShapeDtypeStruct((1,), jnp.float32),
        grid_spec=pltpu.PrefetchScalarGridSpec(
            num_scalar_prefetch=1,
            grid=(grid_rows,),
            in_specs=[
                pl.BlockSpec((tile_rows, _LANES), lambda i, n_ref: (i, 0)),
                pl.BlockSpec((tile_rows, _LANES), lambda i, n_ref: (i, 0)),
            ],
            out_specs=pl.BlockSpec(memory_space=pltpu.MemorySpace.SMEM),
            scratch_shapes=[pltpu.VMEM((tile_rows, _LANES), jnp.float32)] * 5,
        ),
        compiler_params=pltpu.CompilerParams(
            dimension_semantics=("arbitrary",),
        ),
    )(n_arr, x, t)
    return out[0]


def _reference(inputs, targets, alpha=1.0, gamma=2.0):
    # Plain-JAX reference mirroring the PyTorch WeightedFocalLoss.forward.
    inputs = inputs.astype(jnp.float32)
    targets = targets.astype(jnp.float32)
    pos_weight = jnp.sum(targets == 0) / (1.0 + jnp.sum(targets == 1))
    weight = jnp.where(targets == 1, pos_weight, 1.0)
    neg_abs = -jnp.abs(inputs)
    bce = jnp.maximum(inputs, 0.0) - inputs * targets + jnp.log(1.0 + jnp.exp(neg_abs))
    pt = jnp.exp(-bce)
    f = alpha * (1.0 - pt) ** gamma * bce
    return jnp.mean(f * weight)


if __name__ == "__main__":
    key = jax.random.PRNGKey(0)
    k1, k2 = jax.random.split(key)

    N = 2000  # not a multiple of 128 -> exercises the iota/N masking path
    inputs = jax.random.normal(k1, (N,), dtype=jnp.float32)
    targets = jax.random.bernoulli(k2, p=0.3, shape=(N,)).astype(jnp.float32)

    ref = _reference(inputs, targets, alpha=1.0, gamma=2.0)

    # Single-tile path (whole problem in one grid step).
    out = jax.block_until_ready(weighted_focal_loss(inputs, targets, alpha=1.0, gamma=2.0))
    assert jnp.allclose(out, ref, rtol=1e-5, atol=1e-6), (out, ref)

    # Multi-step grid path (forces several row tiles + scratch accumulation).
    out_tiled = jax.block_until_ready(
        weighted_focal_loss(inputs, targets, alpha=1.0, gamma=2.0, tile_rows=8))
    assert jnp.allclose(out_tiled, ref, rtol=1e-5, atol=1e-6), (out_tiled, ref)

    print("KERNEL_OK")
</pallas_src>

<mosaic_0001>
module attributes {stable_mosaic.version = 11 : i64} {
  func.func @_weighted_focal_kernel(%arg0: i32, %arg1: memref<1xi32, #tpu.memory_space<smem>>, %arg2: memref<16x128xf32, #tpu.memory_space<vmem>>, %arg3: memref<16x128xf32, #tpu.memory_space<vmem>>, %arg4: memref<1xf32, #tpu.memory_space<smem>>, %arg5: memref<16x128xf32, #tpu.memory_space<vmem>>, %arg6: memref<16x128xf32, #tpu.memory_space<vmem>>, %arg7: memref<16x128xf32, #tpu.memory_space<vmem>>, %arg8: memref<16x128xf32, #tpu.memory_space<vmem>>, %arg9: memref<16x128xf32, #tpu.memory_space<vmem>>) attributes {dimension_semantics = [#tpu.dimension_semantics<arbitrary>], iteration_bounds = array<i64: 1>, scalar_prefetch = 1 : i64, scratch_operands = 5 : i64, tpu.core_type = #tpu.core_type<tc>, window_params = [{transform_indices = @transform_0, window_bounds = array<i64: 16, 128>}, {transform_indices = @transform_1, window_bounds = array<i64: 16, 128>}, {transform_indices = @transform_2, window_bounds = array<i64: 1>}]} {
    %c0_i32 = arith.constant 0 : i32
    %0 = arith.cmpi eq, %arg0, %c0_i32 : i32
    %1 = arith.extui %0 : i1 to i32
    %c0_i32_0 = arith.constant 0 : i32
    %2 = arith.cmpi ne, %1, %c0_i32_0 : i32
    scf.if %2 {
      %cst_36 = arith.constant 0.000000e+00 : f32
      %71 = vector.broadcast %cst_36 : f32 to vector<16x128xf32>
      %c0_37 = arith.constant 0 : index
      %c0_38 = arith.constant 0 : index
      %72 = vector.load %arg5[%c0_37, %c0_38] : memref<16x128xf32, #tpu.memory_space<vmem>>, vector<16x128xf32>
      tpu.vector_store %arg5[%c0_37, %c0_38], %71 {strides = array<i32>} : memref<16x128xf32, #tpu.memory_space<vmem>>, vector<16x128xf32>,
      %cst_39 = arith.constant 0.000000e+00 : f32
      %73 = vector.broadcast %cst_39 : f32 to vector<16x128xf32>
      %c0_40 = arith.constant 0 : index
      %c0_41 = arith.constant 0 : index
      %74 = vector.load %arg6[%c0_40, %c0_41] : memref<16x128xf32, #tpu.memory_space<vmem>>, vector<16x128xf32>
      tpu.vector_store %arg6[%c0_40, %c0_41], %73 {strides = array<i32>} : memref<16x128xf32, #tpu.memory_space<vmem>>, vector<16x128xf32>,
      %cst_42 = arith.constant 0.000000e+00 : f32
      %75 = vector.broadcast %cst_42 : f32 to vector<16x128xf32>
      %c0_43 = arith.constant 0 : index
      %c0_44 = arith.constant 0 : index
      %76 = vector.load %arg7[%c0_43, %c0_44] : memref<16x128xf32, #tpu.memory_space<vmem>>, vector<16x128xf32>
      tpu.vector_store %arg7[%c0_43, %c0_44], %75 {strides = array<i32>} : memref<16x128xf32, #tpu.memory_space<vmem>>, vector<16x128xf32>,
      %cst_45 = arith.constant 0.000000e+00 : f32
      %77 = vector.broadcast %cst_45 : f32 to vector<16x128xf32>
      %c0_46 = arith.constant 0 : index
      %c0_47 = arith.constant 0 : index
      %78 = vector.load %arg8[%c0_46, %c0_47] : memref<16x128xf32, #tpu.memory_space<vmem>>, vector<16x128xf32>
      tpu.vector_store %arg8[%c0_46, %c0_47], %77 {strides = array<i32>} : memref<16x128xf32, #tpu.memory_space<vmem>>, vector<16x128xf32>,
      %cst_48 = arith.constant 0.000000e+00 : f32
      %79 = vector.broadcast %cst_48 : f32 to vector<16x128xf32>
      %c0_49 = arith.constant 0 : index
      %c0_50 = arith.constant 0 : index
      %80 = vector.load %arg9[%c0_49, %c0_50] : memref<16x128xf32, #tpu.memory_space<vmem>>, vector<16x128xf32>
      tpu.vector_store %arg9[%c0_49, %c0_50], %79 {strides = array<i32>} : memref<16x128xf32, #tpu.memory_space<vmem>>, vector<16x128xf32>,
    } else {
    }
    %c0 = arith.constant 0 : index
    %c0_1 = arith.constant 0 : index
    %3 = vector.load %arg2[%c0, %c0_1] : memref<16x128xf32, #tpu.memory_space<vmem>>, vector<16x128xf32>
    %c0_2 = arith.constant 0 : index
    %c0_3 = arith.constant 0 : index
    %4 = vector.load %arg3[%c0_2, %c0_3] : memref<16x128xf32, #tpu.memory_space<vmem>>, vector<16x128xf32>
    %5 = tpu.iota {dimensions = array<i32: 0>} : vector<16x128xi32>
    %6 = tpu.iota {dimensions = array<i32: 1>} : vector<16x128xi32>
    %c16_i32 = arith.constant 16 : i32
    %7 = arith.muli %arg0, %c16_i32 : i32
    %8 = vector.broadcast %7 : i32 to vector<16x128xi32>
    %9 = arith.addi %8, %5 : vector<16x128xi32>
    %c128_i32 = arith.constant 128 : i32
    %10 = vector.broadcast %c128_i32 : i32 to vector<16x128xi32>
    %11 = arith.muli %9, %10 : vector<16x128xi32>
    %12 = arith.addi %11, %6 : vector<16x128xi32>
    %c0_4 = arith.constant 0 : index
    %13 = memref.load %arg1[%c0_4] : memref<1xi32, #tpu.memory_space<smem>>
    %14 = vector.broadcast %13 : i32 to vector<16x128xi32>
    %15 = arith.cmpi slt, %12, %14 : vector<16x128xi32>
    %cst = arith.constant 1.000000e+00 : f32
    %16 = vector.broadcast %cst : f32 to vector<16x128xf32>
    %17 = arith.cmpf oeq, %4, %16 : vector<16x128xf32>
    %18 = arith.andi %15, %17 : vector<16x128xi1>
    %cst_5 = arith.constant 0.000000e+00 : f32
    %19 = vector.broadcast %cst_5 : f32 to vector<16x128xf32>
    %20 = arith.cmpf oeq, %4, %19 : vector<16x128xf32>
    %21 = arith.andi %15, %20 : vector<16x128xi1>
    %22 = math.absf %3 : vector<16x128xf32>
    %cst_6 = arith.constant 0.000000e+00 : f32
    %23 = vector.broadcast %cst_6 : f32 to vector<16x128xf32>
    %24 = arith.subf %23, %22 : vector<16x128xf32>
    %cst_7 = arith.constant 0.000000e+00 : f32
    %25 = vector.broadcast %cst_7 : f32 to vector<16x128xf32>
    %26 = arith.maximumf %3, %25 : vector<16x128xf32>
    %27 = arith.mulf %3, %4 : vector<16x128xf32>
    %28 = arith.subf %26, %27 : vector<16x128xf32>
    %29 = math.exp %24 : vector<16x128xf32>
    %cst_8 = arith.constant 1.000000e+00 : f32
    %30 = vector.broadcast %cst_8 : f32 to vector<16x128xf32>
    %31 = arith.addf %30, %29 : vector<16x128xf32>
    %32 = math.log %31 : vector<16x128xf32>
    %33 = arith.addf %28, %32 : vector<16x128xf32>
    %cst_9 = arith.constant 0.000000e+00 : f32
    %34 = vector.broadcast %cst_9 : f32 to vector<16x128xf32>
    %35 = arith.subf %34, %33 : vector<16x128xf32>
    %36 = math.exp %35 : vector<16x128xf32>
    %cst_10 = arith.constant 1.000000e+00 : f32
    %37 = vector.broadcast %cst_10 : f32 to vector<16x128xf32>
    %38 = arith.subf %37, %36 : vector<16x128xf32>
    %39 = arith.mulf %38, %38 : vector<16x128xf32>
    %cst_11 = arith.constant 1.000000e+00 : f32
    %40 = vector.broadcast %cst_11 : f32 to vector<16x128xf32>
    %41 = arith.mulf %40, %39 : vector<16x128xf32>
    %42 = arith.mulf %41, %33 : vector<16x128xf32>
    %cst_12 = arith.constant 0.000000e+00 : f32
    %43 = vector.broadcast %cst_12 : f32 to vector<16x128xf32>
    %44 = arith.select %15, %42, %43 : vector<16x128xi1>, vector<16x128xf32>
    %cst_13 = arith.constant 0.000000e+00 : f32
    %45 = vector.broadcast %cst_13 : f32 to vector<16x128xf32>
    %46 = arith.select %18, %44, %45 : vector<16x128xi1>, vector<16x128xf32>
    %c0_14 = arith.constant 0 : index
    %c0_15 = arith.constant 0 : index
    %47 = vector.load %arg5[%c0_14, %c0_15] : memref<16x128xf32, #tpu.memory_space<vmem>>, vector<16x128xf32>
    %48 = arith.addf %47, %44 : vector<16x128xf32>
    %c0_16 = arith.constant 0 : index
    %c0_17 = arith.constant 0 : index
    %49 = vector.load %arg5[%c0_16, %c0_17] : memref<16x128xf32, #tpu.memory_space<vmem>>, vector<16x128xf32>
    tpu.vector_store %arg5[%c0_16, %c0_17], %48 {strides = array<i32>} : memref<16x128xf32, #tpu.memory_space<vmem>>, vector<16x128xf32>,
    %c0_18 = arith.constant 0 : index
    %c0_19 = arith.constant 0 : index
    %50 = vector.load %arg6[%c0_18, %c0_19] : memref<16x128xf32, #tpu.memory_space<vmem>>, vector<16x128xf32>
    %51 = arith.addf %50, %46 : vector<16x128xf32>
    %c0_20 = arith.constant 0 : index
    %c0_21 = arith.constant 0 : index
    %52 = vector.load %arg6[%c0_20, %c0_21] : memref<16x128xf32, #tpu.memory_space<vmem>>, vector<16x128xf32>
    tpu.vector_store %arg6[%c0_20, %c0_21], %51 {strides = array<i32>} : memref<16x128xf32, #tpu.memory_space<vmem>>, vector<16x128xf32>,
    %c0_22 = arith.constant 0 : index
    %c0_23 = arith.constant 0 : index
    %53 = vector.load %arg7[%c0_22, %c0_23] : memref<16x128xf32, #tpu.memory_space<vmem>>, vector<16x128xf32>
    %54 = arith.extui %18 : vector<16x128xi1> to vector<16x128xi32>
    %55 = arith.sitofp %54 : vector<16x128xi32> to vector<16x128xf32>
    %56 = arith.addf %53, %55 : vector<16x128xf32>
    %c0_24 = arith.constant 0 : index
    %c0_25 = arith.constant 0 : index
    %57 = vector.load %arg7[%c0_24, %c0_25] : memref<16x128xf32, #tpu.memory_space<vmem>>, vector<16x128xf32>
    tpu.vector_store %arg7[%c0_24, %c0_25], %56 {strides = array<i32>} : memref<16x128xf32, #tpu.memory_space<vmem>>, vector<16x128xf32>,
    %c0_26 = arith.constant 0 : index
    %c0_27 = arith.constant 0 : index
    %58 = vector.load %arg8[%c0_26, %c0_27] : memref<16x128xf32, #tpu.memory_space<vmem>>, vector<16x128xf32>
    %59 = arith.extui %21 : vector<16x128xi1> to vector<16x128xi32>
    %60 = arith.sitofp %59 : vector<16x128xi32> to vector<16x128xf32>
    %61 = arith.addf %58, %60 : vector<16x128xf32>
    %c0_28 = arith.constant 0 : index
    %c0_29 = arith.constant 0 : index
    %62 = vector.load %arg8[%c0_28, %c0_29] : memref<16x128xf32, #tpu.memory_space<vmem>>, vector<16x128xf32>
    tpu.vector_store %arg8[%c0_28, %c0_29], %61 {strides = array<i32>} : memref<16x128xf32, #tpu.memory_space<vmem>>, vector<16x128xf32>,
    %c0_30 = arith.constant 0 : index
    %c0_31 = arith.constant 0 : index
    %63 = vector.load %arg9[%c0_30, %c0_31] : memref<16x128xf32, #tpu.memory_space<vmem>>, vector<16x128xf32>
    %64 = arith.extui %15 : vector<16x128xi1> to vector<16x128xi32>
    %65 = arith.sitofp %64 : vector<16x128xi32> to vector<16x128xf32>
    %66 = arith.addf %63, %65 : vector<16x128xf32>
    %c0_32 = arith.constant 0 : index
    %c0_33 = arith.constant 0 : index
    %67 = vector.load %arg9[%c0_32, %c0_33] : memref<16x128xf32, #tpu.memory_space<vmem>>, vector<16x128xf32>
    tpu.vector_store %arg9[%c0_32, %c0_33], %66 {strides = array<i32>} : memref<16x128xf32, #tpu.memory_space<vmem>>, vector<16x128xf32>,
    %c0_i32_34 = arith.constant 0 : i32
    %68 = arith.cmpi eq, %arg0, %c0_i32_34 : i32
    %69 = arith.extui %68 : i1 to i32
    %c0_i32_35 = arith.constant 0 : i32
    %70 = arith.cmpi ne, %69, %c0_i32_35 : i32
    scf.if %70 {
      %c0_36 = arith.constant 0 : index
      %c0_37 = arith.constant 0 : index
      %71 = vector.load %arg5[%c0_36, %c0_37] : memref<16x128xf32, #tpu.memory_space<vmem>>, vector<16x128xf32>
      %72 = vector.shape_cast %71 : vector<16x128xf32> to vector<1x16x128xf32>
      %cst_38 = arith.constant dense<0.000000e+00> : vector<1xf32>
      %73 = vector.multi_reduction <add>, %72, %cst_38 [1, 2] : vector<1x16x128xf32> to vector<1xf32>
      %74 = vector.shape_cast %73 : vector<1xf32> to vector<1x1x1xf32>
      %75 = vector.extract %74[0, 0, 0] : f32 from vector<1x1x1xf32>
      %c0_39 = arith.constant 0 : index
      %c0_40 = arith.constant 0 : index
      %76 = vector.load %arg6[%c0_39, %c0_40] : memref<16x128xf32, #tpu.memory_space<vmem>>, vector<16x128xf32>
      %77 = vector.shape_cast %76 : vector<16x128xf32> to vector<1x16x128xf32>
      %cst_41 = arith.constant dense<0.000000e+00> : vector<1xf32>
      %78 = vector.multi_reduction <add>, %77, %cst_41 [1, 2] : vector<1x16x128xf32> to vector<1xf32>
      %79 = vector.shape_cast %78 : vector<1xf32> to vector<1x1x1xf32>
      %80 = vector.extract %79[0, 0, 0] : f32 from vector<1x1x1xf32>
      %c0_42 = arith.constant 0 : index
      %c0_43 = arith.constant 0 : index
      %81 = vector.load %arg7[%c0_42, %c0_43] : memref<16x128xf32, #tpu.memory_space<vmem>>, vector<16x128xf32>
      %82 = vector.shape_cast %81 : vector<16x128xf32> to vector<1x16x128xf32>
      %cst_44 = arith.constant dense<0.000000e+00> : vector<1xf32>
      %83 = vector.multi_reduction <add>, %82, %cst_44 [1, 2] : vector<1x16x128xf32> to vector<1xf32>
      %84 = vector.shape_cast %83 : vector<1xf32> to vector<1x1x1xf32>
      %85 = vector.extract %84[0, 0, 0] : f32 from vector<1x1x1xf32>
      %c0_45 = arith.constant 0 : index
      %c0_46 = arith.constant 0 : index
      %86 = vector.load %arg8[%c0_45, %c0_46] : memref<16x128xf32, #tpu.memory_space<vmem>>, vector<16x128xf32>
      %87 = vector.shape_cast %86 : vector<16x128xf32> to vector<1x16x128xf32>
      %cst_47 = arith.constant dense<0.000000e+00> : vector<1xf32>
      %88 = vector.multi_reduction <add>, %87, %cst_47 [1, 2] : vector<1x16x128xf32> to vector<1xf32>
      %89 = vector.shape_cast %88 : vector<1xf32> to vector<1x1x1xf32>
      %90 = vector.extract %89[0, 0, 0] : f32 from vector<1x1x1xf32>
      %c0_48 = arith.constant 0 : index
      %c0_49 = arith.constant 0 : index
      %91 = vector.load %arg9[%c0_48, %c0_49] : memref<16x128xf32, #tpu.memory_space<vmem>>, vector<16x128xf32>
      %92 = vector.shape_cast %91 : vector<16x128xf32> to vector<1x16x128xf32>
      %cst_50 = arith.constant dense<0.000000e+00> : vector<1xf32>
      %93 = vector.multi_reduction <add>, %92, %cst_50 [1, 2] : vector<1x16x128xf32> to vector<1xf32>
      %94 = vector.shape_cast %93 : vector<1xf32> to vector<1x1x1xf32>
      %95 = vector.extract %94[0, 0, 0] : f32 from vector<1x1x1xf32>
      %cst_51 = arith.constant 1.000000e+00 : f32
      %96 = arith.addf %cst_51, %85 : f32
      %97 = arith.divf %90, %96 : f32
      %cst_52 = arith.constant 1.000000e+00 : f32
      %98 = arith.subf %97, %cst_52 : f32
      %99 = arith.mulf %98, %80 : f32
      %100 = arith.addf %75, %99 : f32
      %101 = arith.divf %100, %95 : f32
      %c0_53 = arith.constant 0 : index
      %102 = memref.load %arg4[%c0_53] : memref<1xf32, #tpu.memory_space<smem>>
      memref.store %101, %arg4[%c0_53] : memref<1xf32, #tpu.memory_space<smem>>
    } else {
    }
    return
  }
  func.func @transform_0(%arg0: i32, %arg1: memref<1xi32, #tpu.memory_space<smem>>) -> (i32, i32) {
    %c0_i32 = arith.constant 0 : i32
    %c0_i32_0 = arith.constant 0 : i32
    return %arg0, %c0_i32 : i32, i32
  }
  func.func @transform_1(%arg0: i32, %arg1: memref<1xi32, #tpu.memory_space<smem>>) -> (i32, i32) {
    %c0_i32 = arith.constant 0 : i32
    %c0_i32_0 = arith.constant 0 : i32
    return %arg0, %c0_i32 : i32, i32
  }
  func.func @transform_2(%arg0: i32, %arg1: memref<1xi32, #tpu.memory_space<smem>>) -> i32 {
    %c0_i32 = arith.constant 0 : i32
    %c0_i32_0 = arith.constant 0 : i32
    return %c0_i32 : i32
  }
}

</mosaic_0001>

<llo_original>
// kernel: tpu_custom_call.1
$region0: #{tpu_custom_call.1}
  #allocation0 [shape = 'u32[]', space=smem, size = 0x4, offset = 0x4, fixed_abs, tag = 'smem constant byte address 0x4 - core index']
  #allocation1 [shape = 'u32[144,128]{1,0:T(1,128)}', space=vmem, size = 0x12000, scoped, tag = 'internal scratch']
  #allocation2 [shape = 'f32[16,128]{1,0:T(8,128)}', space=vmem, size = 0x2000, scoped, tag = 'scratch operand']
  #allocation3 [shape = 'f32[16,128]{1,0:T(8,128)}', space=vmem, size = 0x2000, scoped, tag = 'scratch operand']
  #allocation4 [shape = 'f32[16,128]{1,0:T(8,128)}', space=vmem, size = 0x2000, scoped, tag = 'scratch operand']
  #allocation5 [shape = 'f32[16,128]{1,0:T(8,128)}', space=vmem, size = 0x2000, scoped, tag = 'scratch operand']
  #allocation6 [shape = 'f32[16,128]{1,0:T(8,128)}', space=vmem, size = 0x2000, scoped, tag = 'scratch operand']
  #allocation7 [shape = 's32[1]{0}', space=sflag, size = 0x4, scoped, tag = 'scoped memory for tpu_custom_call.1']
  #allocation8 [shape = 's32[1]{0:T(128)S(6)}', space=smem, size = 0x200, scoped, tag = 'prefetched SMEM operand 0']
  %s0 = inlined_call_operand.<no memory space> [shape: s32[1], index: 0, kind: input, shape index: {}]
  %s1 = inlined_call_operand.hbm [shape: f32[16,128], index: 1, kind: input, shape index: {}]
  %s2 = inlined_call_operand.hbm [shape: f32[16,128], index: 2, kind: input, shape index: {}]
  %s3 = inlined_call_operand.hbm [shape: f32[1], index: 3, kind: output, shape index: {}]
  %s4 = sld [smem:[#allocation0]]
  $region34: #{tpu_custom_call.1} parent=0
    _
  %s6 = ssub.s32 1, %s4
  %s7 = scalar_select 0, %s6, %s4
  %8 = sst [smem:[#allocation8]] %s0
  $region1: #{tpu_custom_call.1} parent=0
    #allocation9 [shape = 'u8[8192]{0}', space=vmem, size = 0x2000, scoped, tag = 'input window, operand 1, single buffered']
    #allocation10 [shape = 's32[1]{0}', space=sflag, size = 0x4, scoped, tag = 'scoped memory for tpu_custom_call.1']
    #allocation11 [shape = 's32[1]{0}', space=sflag, size = 0x4, scoped, tag = 'scoped memory for tpu_custom_call.1']
    #allocation12 [shape = 'u8[8192]{0}', space=vmem, size = 0x2000, scoped, tag = 'input window, operand 2, single buffered']
    #allocation13 [shape = 's32[1]{0}', space=sflag, size = 0x4, scoped, tag = 'scoped memory for tpu_custom_call.1']
    #allocation14 [shape = 'u8[512]{0}', space=smem, size = 0x200, scoped, tag = 'output window, operand 0, single buffered']
    %9 = vsyncpa [#allocation10], 0
    %10 = vsyncpa [#allocation13], 0
    %11 = vsyncpa [#allocation11], 0
    // Predicated region
    $region2: #{tpu_custom_call.1} parent=1 // pred_check
      _
    $region3: #{tpu_custom_call.1} parent=1 // pred_check_branch
      %13 = sbr.rel (0) target = $region5
    $region4: #{tpu_custom_call.1} parent=1 // pred_region
      %s15 = ssub.s32 256, 256
      %16 = vsyncadd [#allocation10], %s15
      %s17 = sshll.u32 [#allocation9], 4
      %s18 = int_to_ptr.vmem [resolvable:$true] %s17
      %23 = dma.hbm_to_vmem [thread:$0]  %s1, 256, %s18, [#allocation10], 128, 128, 8
    $region5: #{tpu_custom_call.1} parent=1 // pred_fallthru
      _
    // Predicated region
    $region6: #{tpu_custom_call.1} parent=1 // pred_check
      _
    $region7: #{tpu_custom_call.1} parent=1 // pred_check_branch
      %25 = sbr.rel (0) target = $region9
    $region8: #{tpu_custom_call.1} parent=1 // pred_region
      %s27 = ssub.s32 256, 256
      %28 = vsyncadd [#allocation13], %s27
      %s29 = sshll.u32 [#allocation12], 4
      %s30 = int_to_ptr.vmem [resolvable:$true] %s29
      %35 = dma.hbm_to_vmem [thread:$0]  %s2, 256, %s30, [#allocation13], 128, 128, 8
    $region9: #{tpu_custom_call.1} parent=1 // pred_fallthru
      _
    // Predicated region
    $region10: #{tpu_custom_call.1} parent=1 // pred_check
      _
    $region11: #{tpu_custom_call.1} parent=1 // pred_check_branch
      %37 = sbr.rel (0) target = $region13
    $region12: #{tpu_custom_call.1} parent=1 // pred_region
      %38 = dma.done [#allocation10], 256
    $region13: #{tpu_custom_call.1} parent=1 // pred_fallthru
      _
    // Predicated region
    $region14: #{tpu_custom_call.1} parent=1 // pred_check
      _
    $region15: #{tpu_custom_call.1} parent=1 // pred_check_branch
      %40 = sbr.rel (0) target = $region17
    $region16: #{tpu_custom_call.1} parent=1 // pred_region
      %41 = dma.done [#allocation13], 256
    $region17: #{tpu_custom_call.1} parent=1 // pred_fallthru
      _
    %p42 = scmp.eq.s32.totalorder 0, 0
    // Predicated region
    $region18: #{tpu_custom_call.1} parent=1 // pred_check
      %p43 = pneg %p42
    $region19: #{tpu_custom_call.1} parent=1 // pred_check_branch
      %45 = sbr.rel (%p43) target = $region21
    $region20: #{tpu_custom_call.1} parent=1 // pred_region
      %46 = vst [vmem:[#allocation2] sm:$0xff] 0.0
      %47 = vst [vmem:[#allocation2 + $0x8] sm:$0xff] 0.0
      %48 = vst [vmem:[#allocation3] sm:$0xff] 0.0
      %49 = vst [vmem:[#allocation3 + $0x8] sm:$0xff] 0.0
      %50 = vst [vmem:[#allocation4] sm:$0xff] 0.0
      %51 = vst [vmem:[#allocation4 + $0x8] sm:$0xff] 0.0
      %52 = vst [vmem:[#allocation5] sm:$0xff] 0.0
      %53 = vst [vmem:[#allocation5 + $0x8] sm:$0xff] 0.0
      %54 = vst [vmem:[#allocation6] sm:$0xff] 0.0
      %55 = vst [vmem:[#allocation6 + $0x8] sm:$0xff] 0.0
    $region21: #{tpu_custom_call.1} parent=1 // pred_fallthru
      _
    %v56 = vld [vmem:[#allocation9] sm:$0xff]
    %v57 = vld [vmem:[#allocation9 + $0x8] sm:$0xff]
    %v58 = vld [vmem:[#allocation12] sm:$0xff]
    %v59 = vld [vmem:[#allocation12 + $0x8] sm:$0xff]
    %v60 = vlaneseq
    %v61 = vshrl.u32 %v60, 7
    %v62 = vadd.s32 %v61, 8
    %v63 = vlaneseq
    %v64 = vand.u32 %v63, 127
    %s65 = smul.u32 0, 16
    %v66 = vstv %s65
    %v67 = vadd.s32 %v66, %v61
    %v68 = vadd.s32 %v66, %v62
    %v69 = vmul.u32 %v67, 128
    %v70 = vmul.u32 %v68, 128
    %v71 = vadd.s32 %v69, %v64
    %v72 = vadd.s32 %v70, %v64
    %s73 = sld [smem:[#allocation8]]
    %v74 = vstv %s73
    %vm75 = vcmp.lt.s32.totalorder %v71, %v74
    %vm76 = vcmp.lt.s32.totalorder %v72, %v74
    %vm77 = vcmp.eq.f32.partialorder %v58, 1.0
    %vm78 = vcmp.eq.f32.partialorder %v59, 1.0
    %vm79 = vmand %vm75, %vm77
    %vm80 = vmand %vm76, %vm78
    %vm81 = vcmp.eq.f32.partialorder %v58, 0.0
    %vm82 = vcmp.eq.f32.partialorder %v59, 0.0
    %vm83 = vmand %vm75, %vm81
    %vm84 = vmand %vm76, %vm82
    %v85 = vand.u32 2147483647, %v56
    %v86 = vand.u32 2147483647, %v57
    %v87 = vsub.f32 0.0, %v85
    %v88 = vsub.f32 0.0, %v86
    %v89 = vmax.f32 %v56, 0.0
    %v90 = vmax.f32 %v57, 0.0
    %v91 = vmul.f32 %v56, %v58
    %v92 = vmul.f32 %v57, %v59
    %v93 = vsub.f32 %v89, %v91
    %v94 = vsub.f32 %v90, %v92
    %v95 = vmul.f32 %v87, 1.442695
    %v96 = vpow.pop %v95
    %v97 = vmul.f32 %v88, 1.442695
    %v98 = vpow.pop %v97
    %v99 = vadd.f32 %v96, 1.0
    %v100 = vadd.f32 %v98, 1.0
    %v101 = vlog2.pop %v99
    %v102 = vmul.f32 %v101, 0.6931472
    %v103 = vlog2.pop %v100
    %v104 = vmul.f32 %v103, 0.6931472
    %v105 = vadd.f32 %v93, %v102
    %v106 = vadd.f32 %v94, %v104
    %v107 = vsub.f32 0.0, %v105
    %v108 = vsub.f32 0.0, %v106
    %v109 = vmul.f32 %v107, 1.442695
    %v110 = vpow.pop %v109
    %v111 = vmul.f32 %v108, 1.442695
    %v112 = vpow.pop %v111
    %v113 = vsub.f32 1.0, %v110
    %v114 = vsub.f32 1.0, %v112
    %v115 = vmul.f32 %v113, %v113
    %v116 = vmul.f32 %v114, %v114
    %v117 = vmul.f32 %v115, %v105
    %v118 = vmul.f32 %v116, %v106
    %v119 = vsel %vm75, %v117, 0.0
    %v120 = vsel %vm76, %v118, 0.0
    %v121 = vsel %vm79, %v119, 0.0
    %v122 = vsel %vm80, %v120, 0.0
    %v123 = vld [vmem:[#allocation2] sm:$0xff]
    %v124 = vld [vmem:[#allocation2 + $0x8] sm:$0xff]
    %v125 = vadd.f32 %v123, %v119
    %v126 = vadd.f32 %v124, %v120
    %127 = vst [vmem:[#allocation2] sm:$0xff] %v125
    %128 = vst [vmem:[#allocation2 + $0x8] sm:$0xff] %v126
    %v129 = vld [vmem:[#allocation3] sm:$0xff]
    %v130 = vld [vmem:[#allocation3 + $0x8] sm:$0xff]
    %v131 = vadd.f32 %v129, %v121
    %v132 = vadd.f32 %v130, %v122
    %133 = vst [vmem:[#allocation3] sm:$0xff] %v131
    %134 = vst [vmem:[#allocation3 + $0x8] sm:$0xff] %v132
    %v135 = vld [vmem:[#allocation4] sm:$0xff]
    %v136 = vld [vmem:[#allocation4 + $0x8] sm:$0xff]
    %v137 = vsel %vm79, 1, 0
    %v138 = vsel %vm80, 1, 0
    %v139 = vcvt.s32.f32 %v137
    %v140 = vcvt.s32.f32 %v138
    %v141 = vadd.f32 %v135, %v139
    %v142 = vadd.f32 %v136, %v140
    %143 = vst [vmem:[#allocation4] sm:$0xff] %v141
    %144 = vst [vmem:[#allocation4 + $0x8] sm:$0xff] %v142
    %v145 = vld [vmem:[#allocation5] sm:$0xff]
    %v146 = vld [vmem:[#allocation5 + $0x8] sm:$0xff]
    %v147 = vsel %vm83, 1, 0
    %v148 = vsel %vm84, 1, 0
    %v149 = vcvt.s32.f32 %v147
    %v150 = vcvt.s32.f32 %v148
    %v151 = vadd.f32 %v145, %v149
    %v152 = vadd.f32 %v146, %v150
    %153 = vst [vmem:[#allocation5] sm:$0xff] %v151
    %154 = vst [vmem:[#allocation5 + $0x8] sm:$0xff] %v152
    %v155 = vld [vmem:[#allocation6] sm:$0xff]
    %v156 = vld [vmem:[#allocation6 + $0x8] sm:$0xff]
    %v157 = vsel %vm75, 1, 0
    %v158 = vsel %vm76, 1, 0
    %v159 = vcvt.s32.f32 %v157
    %v160 = vcvt.s32.f32 %v158
    %v161 = vadd.f32 %v155, %v159
    %v162 = vadd.f32 %v156, %v160
    %163 = vst [vmem:[#allocation6] sm:$0xff] %v161
    %164 = vst [vmem:[#allocation6 + $0x8] sm:$0xff] %v162
    // Predicated region
    $region22: #{tpu_custom_call.1} parent=1 // pred_check
      %p165 = pneg %p42
    $region23: #{tpu_custom_call.1} parent=1 // pred_check_branch
      %167 = sbr.rel (%p165) target = $region25
    $region24: #{tpu_custom_call.1} parent=1 // pred_region
      %v168 = vld [vmem:[#allocation2] sm:$0xff]
      %v169 = vld [vmem:[#allocation2 + $0x8] sm:$0xff]
      %v170 = vadd.f32 %v168, %v169
      %171 = vadd.xlane.f32.xlu0 %v170
      %v172 = vpop.xlane.xlu0 %171
      %v173 = vrot.slane %v172, 4
      %v174 = vadd.f32 %v172, %v173
      %v175 = vrot.slane %v174, 2
      %v176 = vadd.f32 %v174, %v175
      %v177 = vrot.slane %v176, 1
      %v178 = vadd.f32 %v176, %v177
      %s179 = vtos %v178
      %v180 = vld [vmem:[#allocation3] sm:$0xff]
      %v181 = vld [vmem:[#allocation3 + $0x8] sm:$0xff]
      %v182 = vadd.f32 %v180, %v181
      %183 = vadd.xlane.f32.xlu0 %v182
      %v184 = vpop.xlane.xlu0 %183
      %v185 = vrot.slane %v184, 4
      %v186 = vadd.f32 %v184, %v185
      %v187 = vrot.slane %v186, 2
      %v188 = vadd.f32 %v186, %v187
      %v189 = vrot.slane %v188, 1
      %v190 = vadd.f32 %v188, %v189
      %s191 = vtos %v190
      %v192 = vld [vmem:[#allocation4] sm:$0xff]
      %v193 = vld [vmem:[#allocation4 + $0x8] sm:$0xff]
      %v194 = vadd.f32 %v192, %v193
      %195 = vadd.xlane.f32.xlu0 %v194
      %v196 = vpop.xlane.xlu0 %195
      %v197 = vrot.slane %v196, 4
      %v198 = vadd.f32 %v196, %v197
      %v199 = vrot.slane %v198, 2
      %v200 = vadd.f32 %v198, %v199
      %v201 = vrot.slane %v200, 1
      %v202 = vadd.f32 %v200, %v201
      %s203 = vtos %v202
      %v204 = vld [vmem:[#allocation5] sm:$0xff]
      %v205 = vld [vmem:[#allocation5 + $0x8] sm:$0xff]
      %v206 = vadd.f32 %v204, %v205
      %207 = vadd.xlane.f32.xlu0 %v206
      %v208 = vpop.xlane.xlu0 %207
      %v209 = vrot.slane %v208, 4
      %v210 = vadd.f32 %v208, %v209
      %v211 = vrot.slane %v210, 2
      %v212 = vadd.f32 %v210, %v211
      %v213 = vrot.slane %v212, 1
      %v214 = vadd.f32 %v212, %v213
      %s215 = vtos %v214
      %v216 = vld [vmem:[#allocation6] sm:$0xff]
      %v217 = vld [vmem:[#allocation6 + $0x8] sm:$0xff]
      %v218 = vadd.f32 %v216, %v217
      %219 = vadd.xlane.f32.xlu0 %v218
      %v220 = vpop.xlane.xlu0 %219
      %v221 = vrot.slane %v220, 4
      %v222 = vadd.f32 %v220, %v221
      %v223 = vrot.slane %v222, 2
      %v224 = vadd.f32 %v222, %v223
      %v225 = vrot.slane %v224, 1
      %v226 = vadd.f32 %v224, %v225
      %s227 = vtos %v226
      %s228 = sadd.f32 %s203, 1.0
      %v229 = vstv %s228
      %v230 = vrcp.pop %v229
      %s231 = vtos %v230
      %s232 = smul.f32 %s215, %s231
      %s233 = ssub.f32 %s232, 1.0
      %s234 = smul.f32 %s233, %s191
      %s235 = sadd.f32 %s179, %s234
      %v236 = vstv %s227
      %v237 = vrcp.pop %v236
      %s238 = vtos %v237
      %s239 = smul.f32 %s235, %s238
      %s240 = scalar_lea.smem [#allocation14], 0
      %241 = sst [smem:[%s240]] %s239
    $region25: #{tpu_custom_call.1} parent=1 // pred_fallthru
      _
    // Predicated region
    $region26: #{tpu_custom_call.1} parent=1 // pred_check
      _
    $region27: #{tpu_custom_call.1} parent=1 // pred_check_branch
      %243 = sbr.rel (0) target = $region29
    $region28: #{tpu_custom_call.1} parent=1 // pred_region
      %s245 = ssub.s32 16, 16
      %246 = vsyncadd [#allocation11], %s245
      %249 = dma.smem_to_hbm [#allocation14], 16, %s3, [#allocation11]
    $region29: #{tpu_custom_call.1} parent=1 // pred_fallthru
      _
    // Predicated region
    $region30: #{tpu_custom_call.1} parent=1 // pred_check
      _
    $region31: #{tpu_custom_call.1} parent=1 // pred_check_branch
      %251 = sbr.rel (0) target = $region33
    $region32: #{tpu_custom_call.1} parent=1 // pred_region
      %252 = dma.done [#allocation11], 16
    $region33: #{tpu_custom_call.1} parent=1 // pred_fallthru
      _
    %253 = sfence
    %254 = vsyncpa [#allocation10], 1
    %255 = vsyncpa [#allocation13], 1
    %256 = vsyncpa [#allocation11], 1

</llo_original>
